<compile_context>
chip_gen: v6e
topology: v6e:2x2x1
jax: 0.10.0
libtpu: 0.0.40
codegen_flags: <defaults>
</compile_context>

<pallas_src>
import functools

import jax
import jax.numpy as jnp
from jax.experimental import pallas as pl
from jax.experimental.pallas import tpu as pltpu

_LANE = 128


def _round_up(n: int, m: int) -> int:
    return (n + m - 1) // m * m


# ---------------------------------------------------------------------------
# Kernel
# ---------------------------------------------------------------------------
def _moma_kernel(x_ref, wbig_ref, bbig_ref, wg_ref, bg_ref, wct_ref, bc_ref,
                 out_ref, *, num_experts: int, d: int, d_stride: int):
    E, D, De = num_experts, d, d_stride
    x = x_ref[...]                                            # [TB, D] bf16

    # ---- fused experts + router: one lane-dense bf16 MXU pass, f32 acc ----
    h_big = jnp.dot(x, wbig_ref[...], preferred_element_type=jnp.float32)
    h_big = h_big + bbig_ref[...]                             # [TB, E*De + 128]

    # ---- router softmax over the trailing 128-lane block -------------------
    # (padded router lanes carry a -1e30 bias -> exp underflows to exactly 0)
    logits = h_big[:, E * De:]
    logits = logits - jnp.max(logits, axis=-1, keepdims=True)
    p = jnp.exp(logits)
    rw = p * pl.reciprocal(jnp.sum(p, axis=-1, keepdims=True), approx=True)

    # ---- experts: ReLU + routing-weighted sum (pure VPU) -------------------
    # Every expert slice starts on a 128-lane boundary (stride De), so no
    # cross-lane rotates are needed.
    combined = jnp.maximum(h_big[:, 0:D], 0.0) * rw[:, 0:1]
    for i in range(1, E):                                     # static unroll
        combined = combined + (jnp.maximum(h_big[:, i * De:i * De + D], 0.0)
                               * rw[:, i:i + 1])

    # ---- gate: Linear + Sigmoid (bf16 operands, f32 accumulate) ------------
    g = jnp.dot(combined.astype(jnp.bfloat16), wg_ref[...],
                preferred_element_type=jnp.float32) + bg_ref[...]
    gated = jax.nn.sigmoid(g)                                 # [TB, D] f32

    # ---- classifier, lane-packed: batch results land on lanes --------------
    # out_row[0, t] = sum_d wc[d] * gated[t, d]  ->  [1, TB] dense store.
    out_row = jnp.einsum("od,td->ot", wct_ref[...],
                         gated.astype(jnp.bfloat16),
                         preferred_element_type=jnp.float32)  # [1, TB]
    out_ref[...] = (out_row + bc_ref[...]).astype(out_ref.dtype)


# ---------------------------------------------------------------------------
# One-time weight packing (cached; NOT rebuilt per forward call)
# ---------------------------------------------------------------------------
def _pack_modality(wr, br, we, be, wg, bg):
    E, D, _ = we.shape
    De = _round_up(D, _LANE)                  # 128-aligned expert column stride
    Er = _round_up(max(E, 1), _LANE)          # router block padded to 128 lanes
    slab_w = E * De + Er                      # multiple of 128

    w_big = jnp.zeros((D, slab_w), jnp.float32)
    b_big = jnp.zeros((1, slab_w), jnp.float32)
    for i in range(E):
        w_big = w_big.at[:, i * De:i * De + D].set(we[i])
        b_big = b_big.at[:, i * De:i * De + D].set(be[i][None, :])
    w_big = w_big.at[:, E * De:E * De + E].set(wr)
    b_big = b_big.at[:, E * De:].set(-1e30)   # dead router lanes -> softmax 0
    b_big = b_big.at[:, E * De:E * De + E].set(br)

    return {
        "w_big": w_big.astype(jnp.bfloat16),  # bf16: full-rate MXU, half bytes
        "b_big": b_big,                       # biases kept f32
        "wg": wg.astype(jnp.bfloat16),
        "bg": bg.astype(jnp.float32),
        "E": E, "D": D, "De": De, "slab_w": slab_w,
    }


def prepare_moma_params(params):
    """Build the fused weight slabs ONCE (not on every forward call)."""
    return {
        "text": _pack_modality(params["text_router_w"], params["text_router_b"],
                               params["text_experts_w"], params["text_experts_b"],
                               params["text_gate_w"], params["text_gate_b"]),
        "image": _pack_modality(params["image_router_w"], params["image_router_b"],
                                params["image_experts_w"], params["image_experts_b"],
                                params["image_gate_w"], params["image_gate_b"]),
        "wct": params["classifier_w"].T.astype(jnp.bfloat16),   # [1, D]
        "bc": params["classifier_b"].astype(jnp.float32),       # [1, 1]
    }


# ---------------------------------------------------------------------------
# Forward wrapper
# ---------------------------------------------------------------------------
def moma_forward(x, packed, modality: str = "text"):
    """x: [B, D] float32.  Returns [B, 1] float32."""
    if modality not in ("text", "image"):
        raise ValueError(modality)
    mp = packed[modality]
    E, D, De, slab_w = mp["E"], mp["D"], mp["De"], mp["slab_w"]
    wct, bc = packed["wct"], packed["bc"]

    B = x.shape[0]
    TB = B if B <= 512 else 512               # large batch tiles (~85% roofline)
    num_tiles = pl.cdiv(B, TB)
    total = num_tiles * TB
    xb = x.astype(jnp.bfloat16)

    # Resident / streamed byte accounting for vmem_limit + cost estimate.
    weight_bytes = ((mp["w_big"].size + mp["wg"].size + wct.size) * 2
                    + (mp["b_big"].size + mp["bg"].size + bc.size) * 4)
    stream_bytes = 2 * (TB * D * 2 + TB * 4)          # double-buffered x / out
    temp_bytes = TB * slab_w * 4 + 6 * TB * D * 4     # h_big + f32 temporaries

    flops = (2 * B * D * slab_w + 2 * B * D * D + 2 * B * D + 4 * B * E * D)
    transcendentals = B * (slab_w - E * De) + B * D
    bytes_accessed = int(B * D * 2 + weight_bytes + total * 4)

    kernel = functools.partial(_moma_kernel, num_experts=E, d=D, d_stride=De)
    const = lambda i: (0, 0)

    def build(weight_pipeline_mode):
        def wspec(shape):
            if weight_pipeline_mode is None:
                return pl.BlockSpec(shape, const)
            return pl.BlockSpec(shape, const, pipeline_mode=weight_pipeline_mode)

        nbuf = 1 if weight_pipeline_mode is not None else 2
        need = nbuf * weight_bytes + stream_bytes + temp_bytes
        vmem_limit = min(int(need * 1.5) + (8 << 20), 96 * 1024 * 1024)

        return pl.pallas_call(
            kernel,
            out_shape=jax.ShapeDtypeStruct((1, total), jnp.float32),
            grid=(num_tiles,),
            in_specs=[
                pl.BlockSpec((TB, D), lambda i: (i, 0)),   # x (pipelined)
                wspec((D, slab_w)),                        # fused expert+router W
                wspec((1, slab_w)),                        # fused bias
                wspec((D, D)),                             # gate W
                wspec((1, D)),                             # gate b
                wspec((1, D)),                             # classifier W^T
                wspec((1, 1)),                             # classifier b
            ],
            out_specs=pl.BlockSpec((1, TB), lambda i: (0, i)),
            compiler_params=pltpu.CompilerParams(
                dimension_semantics=("parallel",),
                vmem_limit_bytes=vmem_limit),
            cost_estimate=pl.CostEstimate(
                flops=flops,
                transcendentals=transcendentals,
                bytes_accessed=bytes_accessed),
        )

    args = (xb, mp["w_big"], mp["b_big"], mp["wg"], mp["bg"], wct, bc)
    try:
        # Constant-index weights never change across the batch grid: request
        # single buffering so they are not double-resident in VMEM.
        out = build(pl.Buffered(1))(*args)
    except Exception:
        # JAX build without BlockSpec.pipeline_mode support: default buffering.
        out = build(None)(*args)

    # TODO(synk): for production-scale D on v7x (64 MiB VMEM per TensorCore,
    # per-core weight copies under the "parallel" batch axis), add a trailing
    # "arbitrary" grid axis that K-tiles the D contraction of the slab/gate
    # matmuls with an f32 VMEM accumulator; unnecessary at these demo shapes.
    return out[0, :B].reshape(B, 1)


# ---------------------------------------------------------------------------
# Synthetic params + pure-JAX reference
# ---------------------------------------------------------------------------
def _init_params(key, input_dim, num_text_experts, num_image_experts):
    keys = jax.random.split(key, 16)
    D, Et, Ei = input_dim, num_text_experts, num_image_experts
    s = 0.05

    def w(k, shape):
        return (s * jax.random.normal(k, shape)).astype(jnp.float32)

    return {
        "text_experts_w": w(keys[0], (Et, D, D)),
        "text_experts_b": w(keys[1], (Et, D)),
        "image_experts_w": w(keys[2], (Ei, D, D)),
        "image_experts_b": w(keys[3], (Ei, D)),
        "text_router_w": w(keys[4], (D, Et)),
        "text_router_b": w(keys[5], (1, Et)),
        "image_router_w": w(keys[6], (D, Ei)),
        "image_router_b": w(keys[7], (1, Ei)),
        "text_gate_w": w(keys[8], (D, D)),
        "text_gate_b": w(keys[9], (1, D)),
        "image_gate_w": w(keys[10], (D, D)),
        "image_gate_b": w(keys[11], (1, D)),
        "classifier_w": w(keys[12], (D, 1)),
        "classifier_b": w(keys[13], (1, 1)),
    }


def _reference(x, params, modality="text"):
    if modality == "text":
        wr, br = params["text_router_w"], params["text_router_b"]
        we, be = params["text_experts_w"], params["text_experts_b"]
        wg, bg = params["text_gate_w"], params["text_gate_b"]
    else:
        wr, br = params["image_router_w"], params["image_router_b"]
        we, be = params["image_experts_w"], params["image_experts_b"]
        wg, bg = params["image_gate_w"], params["image_gate_b"]
    rw = jax.nn.softmax(x @ wr + br, axis=-1)
    combined = jnp.zeros_like(x)
    for i in range(we.shape[0]):
        h = jax.nn.relu(x @ we[i] + be[i])
        combined = combined + h * rw[:, i:i + 1]
    gated = jax.nn.sigmoid(combined @ wg + bg)
    return gated @ params["classifier_w"] + params["classifier_b"]


if __name__ == "__main__":
    B, D = 8, 32
    NUM_TEXT_EXPERTS, NUM_IMAGE_EXPERTS = 4, 4

    key = jax.random.PRNGKey(0)
    k_x, k_p = jax.random.split(key)
    x = jax.random.normal(k_x, (B, D), dtype=jnp.float32)
    params = _init_params(k_p, D, NUM_TEXT_EXPERTS, NUM_IMAGE_EXPERTS)

    packed = prepare_moma_params(params)      # fused slabs built once, cached

    out_text = moma_forward(x, packed, modality="text")
    out_image = moma_forward(x, packed, modality="image")
    jax.block_until_ready((out_text, out_image))

    # Sanity check vs. pure-f32 reference (tolerance covers bf16 operands and
    # the EUP approximate reciprocal in the softmax normalizer).
    ref_text = _reference(x, params, "text")
    ref_image = _reference(x, params, "image")
    assert out_text.shape == (B, 1) and out_image.shape == (B, 1)
    assert jnp.allclose(out_text, ref_text, atol=1e-2, rtol=1e-2), (
        float(jnp.max(jnp.abs(out_text - ref_text))))
    assert jnp.allclose(out_image, ref_image, atol=1e-2, rtol=1e-2), (
        float(jnp.max(jnp.abs(out_image - ref_image))))

    print("KERNEL_OK")
</pallas_src>

<mosaic_0001>
module attributes {stable_mosaic.version = 11 : i64} {
  func.func @_moma_kernel(%arg0: i32, %arg1: memref<8x32xbf16, #tpu.memory_space<vmem>>, %arg2: memref<32x640xbf16, #tpu.memory_space<vmem>>, %arg3: memref<1x640xf32, #tpu.memory_space<vmem>>, %arg4: memref<32x32xbf16, #tpu.memory_space<vmem>>, %arg5: memref<1x32xf32, #tpu.memory_space<vmem>>, %arg6: memref<1x32xbf16, #tpu.memory_space<vmem>>, %arg7: memref<1x1xf32, #tpu.memory_space<vmem>>, %arg8: memref<1x8xf32, #tpu.memory_space<vmem>>) attributes {dimension_semantics = [#tpu.dimension_semantics<parallel>], iteration_bounds = array<i64: 1>, scalar_prefetch = 0 : i64, scratch_operands = 0 : i64, tpu.core_type = #tpu.core_type<tc>, window_params = [{transform_indices = @transform_0, window_bounds = array<i64: 8, 32>}, {pipeline_mode = #tpu.pipeline_mode<synchronous>, transform_indices = @transform_1, window_bounds = array<i64: 32, 640>}, {pipeline_mode = #tpu.pipeline_mode<synchronous>, transform_indices = @transform_2, window_bounds = array<i64: 1, 640>}, {pipeline_mode = #tpu.pipeline_mode<synchronous>, transform_indices = @transform_3, window_bounds = array<i64: 32, 32>}, {pipeline_mode = #tpu.pipeline_mode<synchronous>, transform_indices = @transform_4, window_bounds = array<i64: 1, 32>}, {pipeline_mode = #tpu.pipeline_mode<synchronous>, transform_indices = @transform_5, window_bounds = array<i64: 1, 32>}, {pipeline_mode = #tpu.pipeline_mode<synchronous>, transform_indices = @transform_6, window_bounds = array<i64: 1, 1>}, {transform_indices = @transform_7, window_bounds = array<i64: 1, 8>}]} {
    %c0 = arith.constant 0 : index
    %c0_0 = arith.constant 0 : index
    %0 = vector.load %arg1[%c0, %c0_0] : memref<8x32xbf16, #tpu.memory_space<vmem>>, vector<8x32xbf16>
    %c0_1 = arith.constant 0 : index
    %c0_2 = arith.constant 0 : index
    %1 = vector.load %arg2[%c0_1, %c0_2] : memref<32x640xbf16, #tpu.memory_space<vmem>>, vector<32x640xbf16>
    %cst = arith.constant dense<0.000000e+00> : vector<8x640xf32>
    %2 = tpu.matmul %0, %1, %cst {dimension_numbers = #tpu.dot_dimension_numbers<[1], [0], [0], [1], [0, 0, 1, 1], [], []>} : vector<8x32xbf16>, vector<32x640xbf16>, vector<8x640xf32> -> vector<8x640xf32>
    %c0_3 = arith.constant 0 : index
    %c0_4 = arith.constant 0 : index
    %3 = vector.load %arg3[%c0_3, %c0_4] : memref<1x640xf32, #tpu.memory_space<vmem>>, vector<1x640xf32>
    %4 = vector.broadcast %3 : vector<1x640xf32> to vector<8x640xf32>
    %5 = arith.addf %2, %4 : vector<8x640xf32>
    %6 = vector.extract_strided_slice %5 {offsets = [0, 512], sizes = [8, 128], strides = [1, 1]} : vector<8x640xf32> to vector<8x128xf32>
    %cst_5 = arith.constant dense<0xFF800000> : vector<8xf32>
    %7 = vector.multi_reduction <maximumf>, %6, %cst_5 [1] : vector<8x128xf32> to vector<8xf32>
    %8 = vector.shape_cast %7 : vector<8xf32> to vector<8x1xf32>
    %9 = vector.broadcast %8 : vector<8x1xf32> to vector<8x128xf32>
    %10 = arith.subf %6, %9 : vector<8x128xf32>
    %11 = math.exp %10 : vector<8x128xf32>
    %cst_6 = arith.constant dense<0.000000e+00> : vector<8xf32>
    %12 = vector.multi_reduction <add>, %11, %cst_6 [1] : vector<8x128xf32> to vector<8xf32>
    %13 = vector.shape_cast %12 : vector<8xf32> to vector<8x1xf32>
    %14 = tpu.reciprocal %13 {approx = true} : vector<8x1xf32> -> vector<8x1xf32>
    %15 = vector.broadcast %14 : vector<8x1xf32> to vector<8x128xf32>
    %16 = arith.mulf %11, %15 : vector<8x128xf32>
    %17 = vector.extract_strided_slice %5 {offsets = [0, 0], sizes = [8, 32], strides = [1, 1]} : vector<8x640xf32> to vector<8x32xf32>
    %cst_7 = arith.constant 0.000000e+00 : f32
    %18 = vector.broadcast %cst_7 : f32 to vector<8x32xf32>
    %19 = arith.maximumf %17, %18 : vector<8x32xf32>
    %20 = vector.extract_strided_slice %16 {offsets = [0, 0], sizes = [8, 1], strides = [1, 1]} : vector<8x128xf32> to vector<8x1xf32>
    %21 = vector.broadcast %20 : vector<8x1xf32> to vector<8x32xf32>
    %22 = arith.mulf %19, %21 : vector<8x32xf32>
    %23 = vector.extract_strided_slice %5 {offsets = [0, 128], sizes = [8, 32], strides = [1, 1]} : vector<8x640xf32> to vector<8x32xf32>
    %cst_8 = arith.constant 0.000000e+00 : f32
    %24 = vector.broadcast %cst_8 : f32 to vector<8x32xf32>
    %25 = arith.maximumf %23, %24 : vector<8x32xf32>
    %26 = vector.extract_strided_slice %16 {offsets = [0, 1], sizes = [8, 1], strides = [1, 1]} : vector<8x128xf32> to vector<8x1xf32>
    %27 = vector.broadcast %26 : vector<8x1xf32> to vector<8x32xf32>
    %28 = arith.mulf %25, %27 : vector<8x32xf32>
    %29 = arith.addf %22, %28 : vector<8x32xf32>
    %30 = vector.extract_strided_slice %5 {offsets = [0, 256], sizes = [8, 32], strides = [1, 1]} : vector<8x640xf32> to vector<8x32xf32>
    %cst_9 = arith.constant 0.000000e+00 : f32
    %31 = vector.broadcast %cst_9 : f32 to vector<8x32xf32>
    %32 = arith.maximumf %30, %31 : vector<8x32xf32>
    %33 = vector.extract_strided_slice %16 {offsets = [0, 2], sizes = [8, 1], strides = [1, 1]} : vector<8x128xf32> to vector<8x1xf32>
    %34 = vector.broadcast %33 : vector<8x1xf32> to vector<8x32xf32>
    %35 = arith.mulf %32, %34 : vector<8x32xf32>
    %36 = arith.addf %29, %35 : vector<8x32xf32>
    %37 = vector.extract_strided_slice %5 {offsets = [0, 384], sizes = [8, 32], strides = [1, 1]} : vector<8x640xf32> to vector<8x32xf32>
    %cst_10 = arith.constant 0.000000e+00 : f32
    %38 = vector.broadcast %cst_10 : f32 to vector<8x32xf32>
    %39 = arith.maximumf %37, %38 : vector<8x32xf32>
    %40 = vector.extract_strided_slice %16 {offsets = [0, 3], sizes = [8, 1], strides = [1, 1]} : vector<8x128xf32> to vector<8x1xf32>
    %41 = vector.broadcast %40 : vector<8x1xf32> to vector<8x32xf32>
    %42 = arith.mulf %39, %41 : vector<8x32xf32>
    %43 = arith.addf %36, %42 : vector<8x32xf32>
    %44 = arith.truncf %43 : vector<8x32xf32> to vector<8x32xbf16>
    %c0_11 = arith.constant 0 : index
    %c0_12 = arith.constant 0 : index
    %45 = vector.load %arg4[%c0_11, %c0_12] : memref<32x32xbf16, #tpu.memory_space<vmem>>, vector<32x32xbf16>
    %cst_13 = arith.constant dense<0.000000e+00> : vector<8x32xf32>
    %46 = tpu.matmul %44, %45, %cst_13 {dimension_numbers = #tpu.dot_dimension_numbers<[1], [0], [0], [1], [0, 0, 1, 1], [], []>} : vector<8x32xbf16>, vector<32x32xbf16>, vector<8x32xf32> -> vector<8x32xf32>
    %c0_14 = arith.constant 0 : index
    %c0_15 = arith.constant 0 : index
    %47 = vector.load %arg5[%c0_14, %c0_15] : memref<1x32xf32, #tpu.memory_space<vmem>>, vector<1x32xf32>
    %48 = vector.broadcast %47 : vector<1x32xf32> to vector<8x32xf32>
    %49 = arith.addf %46, %48 : vector<8x32xf32>
    %50 = arith.negf %49 : vector<8x32xf32>
    %51 = math.exp %50 : vector<8x32xf32>
    %cst_16 = arith.constant 1.000000e+00 : f32
    %52 = vector.broadcast %cst_16 : f32 to vector<8x32xf32>
    %53 = arith.addf %52, %51 : vector<8x32xf32>
    %54 = arith.divf %52, %53 : vector<8x32xf32>
    %c0_17 = arith.constant 0 : index
    %c0_18 = arith.constant 0 : index
    %55 = vector.load %arg6[%c0_17, %c0_18] : memref<1x32xbf16, #tpu.memory_space<vmem>>, vector<1x32xbf16>
    %56 = arith.truncf %54 : vector<8x32xf32> to vector<8x32xbf16>
    "tpu.trace_start"() <{level = 10 : i32, message = "od,td->ot"}> : () -> ()
    %cst_19 = arith.constant dense<0.000000e+00> : vector<1x8xf32>
    %57 = tpu.matmul %55, %56, %cst_19 {dimension_numbers = #tpu.dot_dimension_numbers<[1], [1], [0], [0], [0, 0, 1, 0], [], []>} : vector<1x32xbf16>, vector<8x32xbf16>, vector<1x8xf32> -> vector<1x8xf32>
    "tpu.trace_stop"() : () -> ()
    %c0_20 = arith.constant 0 : index
    %c0_21 = arith.constant 0 : index
    %58 = vector.load %arg7[%c0_20, %c0_21] : memref<1x1xf32, #tpu.memory_space<vmem>>, vector<1x1xf32>
    %59 = vector.broadcast %58 : vector<1x1xf32> to vector<1x8xf32>
    %60 = arith.addf %57, %59 : vector<1x8xf32>
    %c0_22 = arith.constant 0 : index
    %c0_23 = arith.constant 0 : index
    %61 = vector.load %arg8[%c0_22, %c0_23] : memref<1x8xf32, #tpu.memory_space<vmem>>, vector<1x8xf32>
    tpu.vector_store %arg8[%c0_22, %c0_23], %60 {strides = array<i32>} : memref<1x8xf32, #tpu.memory_space<vmem>>, vector<1x8xf32>,
    return
  }
  func.func @transform_0(%arg0: i32) -> (i32, i32) {
    %c0_i32 = arith.constant 0 : i32
    %c0_i32_0 = arith.constant 0 : i32
    return %arg0, %c0_i32 : i32, i32
  }
  func.func @transform_1(%arg0: i32) -> (i32, i32) {
    %c0_i32 = arith.constant 0 : i32
    %c0_i32_0 = arith.constant 0 : i32
    %c0_i32_1 = arith.constant 0 : i32
    return %c0_i32, %c0_i32_0 : i32, i32
  }
  func.func @transform_2(%arg0: i32) -> (i32, i32) {
    %c0_i32 = arith.constant 0 : i32
    %c0_i32_0 = arith.constant 0 : i32
    %c0_i32_1 = arith.constant 0 : i32
    return %c0_i32, %c0_i32_0 : i32, i32
  }
  func.func @transform_3(%arg0: i32) -> (i32, i32) {
    %c0_i32 = arith.constant 0 : i32
    %c0_i32_0 = arith.constant 0 : i32
    %c0_i32_1 = arith.constant 0 : i32
    return %c0_i32, %c0_i32_0 : i32, i32
  }
  func.func @transform_4(%arg0: i32) -> (i32, i32) {
    %c0_i32 = arith.constant 0 : i32
    %c0_i32_0 = arith.constant 0 : i32
    %c0_i32_1 = arith.constant 0 : i32
    return %c0_i32, %c0_i32_0 : i32, i32
  }
  func.func @transform_5(%arg0: i32) -> (i32, i32) {
    %c0_i32 = arith.constant 0 : i32
    %c0_i32_0 = arith.constant 0 : i32
    %c0_i32_1 = arith.constant 0 : i32
    return %c0_i32, %c0_i32_0 : i32, i32
  }
  func.func @transform_6(%arg0: i32) -> (i32, i32) {
    %c0_i32 = arith.constant 0 : i32
    %c0_i32_0 = arith.constant 0 : i32
    %c0_i32_1 = arith.constant 0 : i32
    return %c0_i32, %c0_i32_0 : i32, i32
  }
  func.func @transform_7(%arg0: i32) -> (i32, i32) {
    %c0_i32 = arith.constant 0 : i32
    %c0_i32_0 = arith.constant 0 : i32
    return %c0_i32, %arg0 : i32, i32
  }
}

module attributes {stable_mosaic.version = 11 : i64} {
  func.func @_moma_kernel(%arg0: i32, %arg1: memref<8x32xbf16, #tpu.memory_space<vmem>>, %arg2: memref<32x640xbf16, #tpu.memory_space<vmem>>, %arg3: memref<1x640xf32, #tpu.memory_space<vmem>>, %arg4: memref<32x32xbf16, #tpu.memory_space<vmem>>, %arg5: memref<1x32xf32, #tpu.memory_space<vmem>>, %arg6: memref<1x32xbf16, #tpu.memory_space<vmem>>, %arg7: memref<1x1xf32, #tpu.memory_space<vmem>>, %arg8: memref<1x8xf32, #tpu.memory_space<vmem>>) attributes {dimension_semantics = [#tpu.dimension_semantics<parallel>], iteration_bounds = array<i64: 1>, scalar_prefetch = 0 : i64, scratch_operands = 0 : i64, tpu.core_type = #tpu.core_type<tc>, window_params = [{transform_indices = @transform_0, window_bounds = array<i64: 8, 32>}, {pipeline_mode = #tpu.pipeline_mode<synchronous>, transform_indices = @transform_1, window_bounds = array<i64: 32, 640>}, {pipeline_mode = #tpu.pipeline_mode<synchronous>, transform_indices = @transform_2, window_bounds = array<i64: 1, 640>}, {pipeline_mode = #tpu.pipeline_mode<synchronous>, transform_indices = @transform_3, window_bounds = array<i64: 32, 32>}, {pipeline_mode = #tpu.pipeline_mode<synchronous>, transform_indices = @transform_4, window_bounds = array<i64: 1, 32>}, {pipeline_mode = #tpu.pipeline_mode<synchronous>, transform_indices = @transform_5, window_bounds = array<i64: 1, 32>}, {pipeline_mode = #tpu.pipeline_mode<synchronous>, transform_indices = @transform_6, window_bounds = array<i64: 1, 1>}, {transform_indices = @transform_7, window_bounds = array<i64: 1, 8>}]} {
    %c0 = arith.constant 0 : index
    %c0_0 = arith.constant 0 : index
    %0 = vector.load %arg1[%c0, %c0_0] : memref<8x32xbf16, #tpu.memory_space<vmem>>, vector<8x32xbf16>
    %c0_1 = arith.constant 0 : index
    %c0_2 = arith.constant 0 : index
    %1 = vector.load %arg2[%c0_1, %c0_2] : memref<32x640xbf16, #tpu.memory_space<vmem>>, vector<32x640xbf16>
    %cst = arith.constant dense<0.000000e+00> : vector<8x640xf32>
    %2 = tpu.matmul %0, %1, %cst {dimension_numbers = #tpu.dot_dimension_numbers<[1], [0], [0], [1], [0, 0, 1, 1], [], []>} : vector<8x32xbf16>, vector<32x640xbf16>, vector<8x640xf32> -> vector<8x640xf32>
    %c0_3 = arith.constant 0 : index
    %c0_4 = arith.constant 0 : index
    %3 = vector.load %arg3[%c0_3, %c0_4] : memref<1x640xf32, #tpu.memory_space<vmem>>, vector<1x640xf32>
    %4 = vector.broadcast %3 : vector<1x640xf32> to vector<8x640xf32>
    %5 = arith.addf %2, %4 : vector<8x640xf32>
    %6 = vector.extract_strided_slice %5 {offsets = [0, 512], sizes = [8, 128], strides = [1, 1]} : vector<8x640xf32> to vector<8x128xf32>
    %cst_5 = arith.constant dense<0xFF800000> : vector<8xf32>
    %7 = vector.multi_reduction <maximumf>, %6, %cst_5 [1] : vector<8x128xf32> to vector<8xf32>
    %8 = vector.shape_cast %7 : vector<8xf32> to vector<8x1xf32>
    %9 = vector.broadcast %8 : vector<8x1xf32> to vector<8x128xf32>
    %10 = arith.subf %6, %9 : vector<8x128xf32>
    %11 = math.exp %10 : vector<8x128xf32>
    %cst_6 = arith.constant dense<0.000000e+00> : vector<8xf32>
    %12 = vector.multi_reduction <add>, %11, %cst_6 [1] : vector<8x128xf32> to vector<8xf32>
    %13 = vector.shape_cast %12 : vector<8xf32> to vector<8x1xf32>
    %14 = tpu.reciprocal %13 {approx = true} : vector<8x1xf32> -> vector<8x1xf32>
    %15 = vector.broadcast %14 : vector<8x1xf32> to vector<8x128xf32>
    %16 = arith.mulf %11, %15 : vector<8x128xf32>
    %17 = vector.extract_strided_slice %5 {offsets = [0, 0], sizes = [8, 32], strides = [1, 1]} : vector<8x640xf32> to vector<8x32xf32>
    %cst_7 = arith.constant 0.000000e+00 : f32
    %18 = vector.broadcast %cst_7 : f32 to vector<8x32xf32>
    %19 = arith.maximumf %17, %18 : vector<8x32xf32>
    %20 = vector.extract_strided_slice %16 {offsets = [0, 0], sizes = [8, 1], strides = [1, 1]} : vector<8x128xf32> to vector<8x1xf32>
    %21 = vector.broadcast %20 : vector<8x1xf32> to vector<8x32xf32>
    %22 = arith.mulf %19, %21 : vector<8x32xf32>
    %23 = vector.extract_strided_slice %5 {offsets = [0, 128], sizes = [8, 32], strides = [1, 1]} : vector<8x640xf32> to vector<8x32xf32>
    %cst_8 = arith.constant 0.000000e+00 : f32
    %24 = vector.broadcast %cst_8 : f32 to vector<8x32xf32>
    %25 = arith.maximumf %23, %24 : vector<8x32xf32>
    %26 = vector.extract_strided_slice %16 {offsets = [0, 1], sizes = [8, 1], strides = [1, 1]} : vector<8x128xf32> to vector<8x1xf32>
    %27 = vector.broadcast %26 : vector<8x1xf32> to vector<8x32xf32>
    %28 = arith.mulf %25, %27 : vector<8x32xf32>
    %29 = arith.addf %22, %28 : vector<8x32xf32>
    %30 = vector.extract_strided_slice %5 {offsets = [0, 256], sizes = [8, 32], strides = [1, 1]} : vector<8x640xf32> to vector<8x32xf32>
    %cst_9 = arith.constant 0.000000e+00 : f32
    %31 = vector.broadcast %cst_9 : f32 to vector<8x32xf32>
    %32 = arith.maximumf %30, %31 : vector<8x32xf32>
    %33 = vector.extract_strided_slice %16 {offsets = [0, 2], sizes = [8, 1], strides = [1, 1]} : vector<8x128xf32> to vector<8x1xf32>
    %34 = vector.broadcast %33 : vector<8x1xf32> to vector<8x32xf32>
    %35 = arith.mulf %32, %34 : vector<8x32xf32>
    %36 = arith.addf %29, %35 : vector<8x32xf32>
    %37 = vector.extract_strided_slice %5 {offsets = [0, 384], sizes = [8, 32], strides = [1, 1]} : vector<8x640xf32> to vector<8x32xf32>
    %cst_10 = arith.constant 0.000000e+00 : f32
    %38 = vector.broadcast %cst_10 : f32 to vector<8x32xf32>
    %39 = arith.maximumf %37, %38 : vector<8x32xf32>
    %40 = vector.extract_strided_slice %16 {offsets = [0, 3], sizes = [8, 1], strides = [1, 1]} : vector<8x128xf32> to vector<8x1xf32>
    %41 = vector.broadcast %40 : vector<8x1xf32> to vector<8x32xf32>
    %42 = arith.mulf %39, %41 : vector<8x32xf32>
    %43 = arith.addf %36, %42 : vector<8x32xf32>
    %44 = arith.truncf %43 : vector<8x32xf32> to vector<8x32xbf16>
    %c0_11 = arith.constant 0 : index
    %c0_12 = arith.constant 0 : index
    %45 = vector.load %arg4[%c0_11, %c0_12] : memref<32x32xbf16, #tpu.memory_space<vmem>>, vector<32x32xbf16>
    %cst_13 = arith.constant dense<0.000000e+00> : vector<8x32xf32>
    %46 = tpu.matmul %44, %45, %cst_13 {dimension_numbers = #tpu.dot_dimension_numbers<[1], [0], [0], [1], [0, 0, 1, 1], [], []>} : vector<8x32xbf16>, vector<32x32xbf16>, vector<8x32xf32> -> vector<8x32xf32>
    %c0_14 = arith.constant 0 : index
    %c0_15 = arith.constant 0 : index
    %47 = vector.load %arg5[%c0_14, %c0_15] : memref<1x32xf32, #tpu.memory_space<vmem>>, vector<1x32xf32>
    %48 = vector.broadcast %47 : vector<1x32xf32> to vector<8x32xf32>
    %49 = arith.addf %46, %48 : vector<8x32xf32>
    %50 = arith.negf %49 : vector<8x32xf32>
    %51 = math.exp %50 : vector<8x32xf32>
    %cst_16 = arith.constant 1.000000e+00 : f32
    %52 = vector.broadcast %cst_16 : f32 to vector<8x32xf32>
    %53 = arith.addf %52, %51 : vector<8x32xf32>
    %54 = arith.divf %52, %53 : vector<8x32xf32>
    %c0_17 = arith.constant 0 : index
    %c0_18 = arith.constant 0 : index
    %55 = vector.load %arg6[%c0_17, %c0_18] : memref<1x32xbf16, #tpu.memory_space<vmem>>, vector<1x32xbf16>
    %56 = arith.truncf %54 : vector<8x32xf32> to vector<8x32xbf16>
    "tpu.trace_start"() <{level = 10 : i32, message = "od,td->ot"}> : () -> ()
    %cst_19 = arith.constant dense<0.000000e+00> : vector<1x8xf32>
    %57 = tpu.matmul %55, %56, %cst_19 {dimension_numbers = #tpu.dot_dimension_numbers<[1], [1], [0], [0], [0, 0, 1, 0], [], []>} : vector<1x32xbf16>, vector<8x32xbf16>, vector<1x8xf32> -> vector<1x8xf32>
    "tpu.trace_stop"() : () -> ()
    %c0_20 = arith.constant 0 : index
    %c0_21 = arith.constant 0 : index
    %58 = vector.load %arg7[%c0_20, %c0_21] : memref<1x1xf32, #tpu.memory_space<vmem>>, vector<1x1xf32>
    %59 = vector.broadcast %58 : vector<1x1xf32> to vector<1x8xf32>
    %60 = arith.addf %57, %59 : vector<1x8xf32>
    %c0_22 = arith.constant 0 : index
    %c0_23 = arith.constant 0 : index
    %61 = vector.load %arg8[%c0_22, %c0_23] : memref<1x8xf32, #tpu.memory_space<vmem>>, vector<1x8xf32>
    tpu.vector_store %arg8[%c0_22, %c0_23], %60 {strides = array<i32>} : memref<1x8xf32, #tpu.memory_space<vmem>>, vector<1x8xf32>,
    return
  }
  func.func @transform_0(%arg0: i32) -> (i32, i32) {
    %c0_i32 = arith.constant 0 : i32
    %c0_i32_0 = arith.constant 0 : i32
    return %arg0, %c0_i32 : i32, i32
  }
  func.func @transform_1(%arg0: i32) -> (i32, i32) {
    %c0_i32 = arith.constant 0 : i32
    %c0_i32_0 = arith.constant 0 : i32
    %c0_i32_1 = arith.constant 0 : i32
    return %c0_i32, %c0_i32_0 : i32, i32
  }
  func.func @transform_2(%arg0: i32) -> (i32, i32) {
    %c0_i32 = arith.constant 0 : i32
    %c0_i32_0 = arith.constant 0 : i32
    %c0_i32_1 = arith.constant 0 : i32
    return %c0_i32, %c0_i32_0 : i32, i32
  }
  func.func @transform_3(%arg0: i32) -> (i32, i32) {
    %c0_i32 = arith.constant 0 : i32
    %c0_i32_0 = arith.constant 0 : i32
    %c0_i32_1 = arith.constant 0 : i32
    return %c0_i32, %c0_i32_0 : i32, i32
  }
  func.func @transform_4(%arg0: i32) -> (i32, i32) {
    %c0_i32 = arith.constant 0 : i32
    %c0_i32_0 = arith.constant 0 : i32
    %c0_i32_1 = arith.constant 0 : i32
    return %c0_i32, %c0_i32_0 : i32, i32
  }
  func.func @transform_5(%arg0: i32) -> (i32, i32) {
    %c0_i32 = arith.constant 0 : i32
    %c0_i32_0 = arith.constant 0 : i32
    %c0_i32_1 = arith.constant 0 : i32
    return %c0_i32, %c0_i32_0 : i32, i32
  }
  func.func @transform_6(%arg0: i32) -> (i32, i32) {
    %c0_i32 = arith.constant 0 : i32
    %c0_i32_0 = arith.constant 0 : i32
    %c0_i32_1 = arith.constant 0 : i32
    return %c0_i32, %c0_i32_0 : i32, i32
  }
  func.func @transform_7(%arg0: i32) -> (i32, i32) {
    %c0_i32 = arith.constant 0 : i32
    %c0_i32_0 = arith.constant 0 : i32
    return %c0_i32, %arg0 : i32, i32
  }
}

</mosaic_0001>

<llo_original>
// kernel: tpu_custom_call.1
$region0: #{tpu_custom_call.1}
  #allocation0 [shape = 'u32[]', space=smem, size = 0x4, offset = 0x4, fixed_abs, tag = 'smem constant byte address 0x4 - core index']
  #allocation1 [shape = 'u32[144,128]{1,0:T(1,128)}', space=vmem, size = 0x12000, scoped, tag = 'internal scratch']
  #allocation2 [shape = 'f32[1,1]{1,0:T(1,128)S(1)}', space=vmem, size = 0x200, scoped, tag = 'scoped memory for tpu_custom_call.1']
  %s0 = inlined_call_operand.hbm [shape: bf16[8,32], index: 0, kind: input, shape index: {}]
  %s1 = inlined_call_operand.hbm [shape: bf16[32,640], index: 1, kind: input, shape index: {}]
  %s2 = inlined_call_operand.vmem [shape: f32[1,640], index: 2, kind: input, shape index: {}]
  %s3 = inlined_call_operand.hbm [shape: bf16[32,32], index: 3, kind: input, shape index: {}]
  %s4 = inlined_call_operand.vmem [shape: f32[1,32], index: 4, kind: input, shape index: {}]
  %s5 = inlined_call_operand.vmem [shape: bf16[1,32], index: 5, kind: input, shape index: {}]
  %s6 = inlined_call_operand.<no memory space> [shape: f32[1,1], index: 6, kind: input, shape index: {}]
  %s7 = inlined_call_operand.hbm [shape: f32[1,8], index: 7, kind: output, shape index: {}]
  %s8 = sld [smem:[#allocation0]]
  $region50: #{tpu_custom_call.1} parent=0
    _
  %s10 = ssub.s32 1, %s8
  %s11 = scalar_select 0, %s10, %s8
  %v12 = vstv %s6
  %13 = vst [vmem:[#allocation2] sm:$0x1] %v12
  $region1: #{tpu_custom_call.1} parent=0
    #allocation3 [shape = 'u8[2048]{0}', space=vmem, size = 0x800, scoped, tag = 'input window, operand 0, single buffered']
    #allocation4 [shape = 's32[1]{0}', space=sflag, size = 0x4, scoped, tag = 'scoped memory for tpu_custom_call.1']
    #allocation5 [shape = 's32[1]{0}', space=sflag, size = 0x4, scoped, tag = 'scoped memory for tpu_custom_call.1']
    #allocation6 [shape = 'u8[40960]{0}', space=vmem, size = 0xa000, scoped, tag = 'input window, operand 1, single buffered']
    #allocation7 [shape = 's32[1]{0}', space=sflag, size = 0x4, scoped, tag = 'scoped memory for tpu_custom_call.1']
    #allocation8 [shape = 'u8[8192]{0}', space=vmem, size = 0x2000, scoped, tag = 'input window, operand 3, single buffered']
    #allocation9 [shape = 'u8[512]{0}', space=vmem, size = 0x400, scoped, tag = 'output window, operand 0, single buffered']
    %14 = vsyncpa [#allocation4], 0
    %15 = vsyncpa [#allocation7], 0
    %16 = vsyncpa [#allocation5], 0
    // Predicated region
    $region2: #{tpu_custom_call.1} parent=1 // pred_check
      _
    $region3: #{tpu_custom_call.1} parent=1 // pred_check_branch
      %18 = sbr.rel (0) target = $region5
    $region4: #{tpu_custom_call.1} parent=1 // pred_region
      %s20 = ssub.s32 64, 64
      %21 = vsyncadd [#allocation4], %s20
      %s23 = sshll.u32 [#allocation3], 4
      %s24 = int_to_ptr.vmem [resolvable:$true] %s23
      %26 = dma.hbm_to_vmem [thread:$0]  %s0, 64, %s24, [#allocation4]
    $region5: #{tpu_custom_call.1} parent=1 // pred_fallthru
      _
    // Predicated region
    $region6: #{tpu_custom_call.1} parent=1 // pred_check
      _
    $region7: #{tpu_custom_call.1} parent=1 // pred_check_branch
      %28 = sbr.rel (0) target = $region9
    $region8: #{tpu_custom_call.1} parent=1 // pred_region
      %s30 = ssub.s32 1280, 1280
      %31 = vsyncadd [#allocation7], %s30
      %s32 = sshll.u32 [#allocation6], 4
      %s33 = int_to_ptr.vmem [resolvable:$true] %s32
      %38 = dma.hbm_to_vmem [thread:$0]  %s1, 1280, %s33, [#allocation7], 320, 320, 20
    $region9: #{tpu_custom_call.1} parent=1 // pred_fallthru
      _
    // Predicated region
    $region10: #{tpu_custom_call.1} parent=1 // pred_check
      _
    $region11: #{tpu_custom_call.1} parent=1 // pred_check_branch
      %40 = sbr.rel (0) target = $region13
    $region12: #{tpu_custom_call.1} parent=1 // pred_region
      _
    $region13: #{tpu_custom_call.1} parent=1 // pred_fallthru
      _
    // Predicated region
    $region14: #{tpu_custom_call.1} parent=1 // pred_check
      _
    $region15: #{tpu_custom_call.1} parent=1 // pred_check_branch
      %42 = sbr.rel (0) target = $region17
    $region16: #{tpu_custom_call.1} parent=1 // pred_region
      %s44 = ssub.s32 256, 256
      %45 = vsyncadd [#allocation7], %s44
      %s46 = sshll.u32 [#allocation8], 4
      %s47 = int_to_ptr.vmem [resolvable:$true] %s46
      %52 = dma.hbm_to_vmem [thread:$0]  %s3, 256, %s47, [#allocation7], 64, 64, 4
    $region17: #{tpu_custom_call.1} parent=1 // pred_fallthru
      _
    // Predicated region
    $region18: #{tpu_custom_call.1} parent=1 // pred_check
      _
    $region19: #{tpu_custom_call.1} parent=1 // pred_check_branch
      %54 = sbr.rel (0) target = $region21
    $region20: #{tpu_custom_call.1} parent=1 // pred_region
      _
    $region21: #{tpu_custom_call.1} parent=1 // pred_fallthru
      _
    // Predicated region
    $region22: #{tpu_custom_call.1} parent=1 // pred_check
      _
    $region23: #{tpu_custom_call.1} parent=1 // pred_check_branch
      %56 = sbr.rel (0) target = $region25
    $region24: #{tpu_custom_call.1} parent=1 // pred_region
      _
    $region25: #{tpu_custom_call.1} parent=1 // pred_fallthru
      _
    // Predicated region
    $region26: #{tpu_custom_call.1} parent=1 // pred_check
      _
    $region27: #{tpu_custom_call.1} parent=1 // pred_check_branch
      %58 = sbr.rel (0) target = $region29
    $region28: #{tpu_custom_call.1} parent=1 // pred_region
      _
    $region29: #{tpu_custom_call.1} parent=1 // pred_fallthru
      _
    // Predicated region
    $region30: #{tpu_custom_call.1} parent=1 // pred_check
      _
    $region31: #{tpu_custom_call.1} parent=1 // pred_check_branch
      %60 = sbr.rel (0) target = $region33
    $region32: #{tpu_custom_call.1} parent=1 // pred_region
      %61 = dma.done [#allocation4], 64
    $region33: #{tpu_custom_call.1} parent=1 // pred_fallthru
      _
    // Predicated region
    $region34: #{tpu_custom_call.1} parent=1 // pred_check
      _
    $region35: #{tpu_custom_call.1} parent=1 // pred_check_branch
      %63 = sbr.rel (0) target = $region37
    $region36: #{tpu_custom_call.1} parent=1 // pred_region
      %64 = dma.done [#allocation7], 1280
    $region37: #{tpu_custom_call.1} parent=1 // pred_fallthru
      _
    // Predicated region
    $region38: #{tpu_custom_call.1} parent=1 // pred_check
      _
    $region39: #{tpu_custom_call.1} parent=1 // pred_check_branch
      %66 = sbr.rel (0) target = $region41
    $region40: #{tpu_custom_call.1} parent=1 // pred_region
      %67 = dma.done [#allocation7], 256
    $region41: #{tpu_custom_call.1} parent=1 // pred_fallthru
      _
    %v69 = vld [vmem:[#allocation3] sm:$0xf]
    %v70 = vld [vmem:[#allocation6] sm:$0xff]
    %v71 = vld [vmem:[#allocation6 + $0x8] sm:$0xff]
    %v72 = vld [vmem:[#allocation6 + $0x10] sm:$0xf]
    %v73 = vld [vmem:[#allocation6 + $0x14] sm:$0xff]
    %v74 = vld [vmem:[#allocation6 + $0x1c] sm:$0xff]
    %v75 = vld [vmem:[#allocation6 + $0x24] sm:$0xf]
    %v76 = vld [vmem:[#allocation6 + $0x28] sm:$0xff]
    %v77 = vld [vmem:[#allocation6 + $0x30] sm:$0xff]
    %v78 = vld [vmem:[#allocation6 + $0x38] sm:$0xf]
    %v79 = vld [vmem:[#allocation6 + $0x3c] sm:$0xff]
    %v80 = vld [vmem:[#allocation6 + $0x44] sm:$0xff]
    %v81 = vld [vmem:[#allocation6 + $0x4c] sm:$0xf]
    %v82 = vld [vmem:[%s2] sm:$0x1f]
    %v84 = vlaneseq
    %v85 = vshrl.u32 %v84, 7
    %v86 = vsub.s32 0, %v85
    %v87 = vrot.slane %v82, %v86
    %v88 = vlaneseq
    %v89 = vshrl.u32 %v88, 7
    %v90 = vsub.s32 1, %v89
    %v91 = vrot.slane %v82, %v90
    %v92 = vlaneseq
    %v93 = vshrl.u32 %v92, 7
    %v94 = vsub.s32 2, %v93
    %v95 = vrot.slane %v82, %v94
    %v96 = vlaneseq
    %v97 = vshrl.u32 %v96, 7
    %v98 = vsub.s32 3, %v97
    %v99 = vrot.slane %v82, %v98
    %v100 = vlaneseq
    %v101 = vshrl.u32 %v100, 7
    %v102 = vsub.s32 4, %v101
    %v103 = vrot.slane %v82, %v102
    %v121 = vunpack.c.l.b16 %v70
    %v122 = vunpack.c.h.b16 %v70
    %v123 = vunpack.c.l.b16 %v71
    %v124 = vunpack.c.h.b16 %v71
    %v125 = vunpack.c.l.b16 %v72
    %v126 = vunpack.c.l.b16 %v73
    %v127 = vunpack.c.h.b16 %v73
    %v128 = vunpack.c.l.b16 %v74
    %v129 = vunpack.c.h.b16 %v74
    %v130 = vunpack.c.l.b16 %v75
    %v131 = vunpack.c.l.b16 %v76
    %v132 = vunpack.c.h.b16 %v76
    %v133 = vunpack.c.l.b16 %v77
    %v134 = vunpack.c.h.b16 %v77
    %v135 = vunpack.c.l.b16 %v78
    %v136 = vunpack.c.l.b16 %v79
    %v137 = vunpack.c.h.b16 %v79
    %v138 = vunpack.c.l.b16 %v80
    %v139 = vunpack.c.h.b16 %v80
    %v140 = vunpack.c.l.b16 %v81
    %v141 = vpack.c.b16 %v126, %v121
    %v142 = vpack.c.b16 %v127, %v122
    %v143 = vpack.c.b16 %v128, %v123
    %v144 = vpack.c.b16 %v129, %v124
    %v145 = vpack.c.b16 %v130, %v125
    %v146 = vpack.c.b16 %v136, %v131
    %v147 = vpack.c.b16 %v137, %v132
    %v148 = vpack.c.b16 %v138, %v133
    %v149 = vpack.c.b16 %v139, %v134
    %v150 = vpack.c.b16 %v140, %v135
    %vm161 = vcmask 261120
    %v163 = vsel %vm161, %v69, 0
    %165 = vmatprep.subr.bf16.mxu0 0
    %166 = vmatpush1.bf16.msra.mxu0 0
    %167 = vmatprep.subr.bf16.mxu0 0
    %168 = vmatpush1.bf16.msra.mxu0 0
    %169 = vmatprep.subr.bf16.mxu0 0
    %170 = vmatpush1.bf16.msra.mxu0 0
    %171 = vmatprep.subr.bf16.mxu0 0
    %172 = vmatpush1.bf16.msra.mxu0 0
    %173 = vmatprep.subr.bf16.mxu0 0
    %174 = vmatpush1.bf16.msra.mxu0 0
    %175 = vmatprep.subr.bf16.mxu0 0
    %176 = vmatpush1.bf16.msra.mxu0 0
    %177 = vmatprep.subr.bf16.mxu0 %v147
    %178 = vmatpush1.bf16.msra.mxu0 %v146
    %179 = vmatprep.subr.bf16.mxu0 %v142
    %180 = vmatpush1.bf16.msra.mxu0 %v141
    %181 = vmatprep.subr.bf16.mxu0 0
    %182 = vmatpush2.bf16.msra.mxu0 0
    %183 = vmatprep.subr.bf16.mxu0 0
    %184 = vmatpush2.bf16.msra.mxu0 0
    %185 = vmatprep.subr.bf16.mxu0 0
    %186 = vmatpush2.bf16.msra.mxu0 0
    %187 = vmatprep.subr.bf16.mxu0 0
    %188 = vmatpush2.bf16.msra.mxu0 0
    %189 = vmatprep.subr.bf16.mxu0 0
    %190 = vmatpush2.bf16.msra.mxu0 0
    %191 = vmatprep.subr.bf16.mxu0 0
    %192 = vmatpush2.bf16.msra.mxu0 0
    %193 = vmatprep.subr.bf16.mxu0 0
    %194 = vmatpush2.bf16.msra.mxu0 0
    %195 = vmatprep.subr.bf16.mxu0 0
    %196 = vmatpush2.bf16.msra.mxu0 0
    %197 = vmatprep.mubr.bf16.mxu0 0
    %198 = vmatmul.mubr.bf16.gmra.mxu0 %v163
    %v199 = vpop.f32.mrf.mxu0
    %v200 = vadd.f32 %v87, %v199
    %v201 = vpop.f32.mrf.mxu0
    %v202 = vadd.f32 %v91, %v201
    %v203 = vpop.f32.mrf.mxu0
    %v204 = vpop.f32.mrf.mxu0
    %205 = vdwg.mxu0
    %206 = vmatprep.subr.bf16.mxu0 0
    %207 = vmatpush1.bf16.msra.mxu0 0
    %208 = vmatprep.subr.bf16.mxu0 0
    %209 = vmatpush1.bf16.msra.mxu0 0
    %210 = vmatprep.subr.bf16.mxu0 0
    %211 = vmatpush1.bf16.msra.mxu0 0
    %212 = vmatprep.subr.bf16.mxu0 0
    %213 = vmatpush1.bf16.msra.mxu0 0
    %214 = vmatprep.subr.bf16.mxu0 0
    %215 = vmatpush1.bf16.msra.mxu0 0
    %216 = vmatprep.subr.bf16.mxu0 0
    %217 = vmatpush1.bf16.msra.mxu0 0
    %218 = vmatprep.subr.bf16.mxu0 %v149
    %219 = vmatpush1.bf16.msra.mxu0 %v148
    %220 = vmatprep.subr.bf16.mxu0 %v144
    %221 = vmatpush1.bf16.msra.mxu0 %v143
    %222 = vmatprep.subr.bf16.mxu0 0
    %223 = vmatpush2.bf16.msra.mxu0 0
    %224 = vmatprep.subr.bf16.mxu0 0
    %225 = vmatpush2.bf16.msra.mxu0 0
    %226 = vmatprep.subr.bf16.mxu0 0
    %227 = vmatpush2.bf16.msra.mxu0 0
    %228 = vmatprep.subr.bf16.mxu0 0
    %229 = vmatpush2.bf16.msra.mxu0 0
    %230 = vmatprep.subr.bf16.mxu0 0
    %231 = vmatpush2.bf16.msra.mxu0 0
    %232 = vmatprep.subr.bf16.mxu0 0
    %233 = vmatpush2.bf16.msra.mxu0 0
    %234 = vmatprep.subr.bf16.mxu0 0
    %235 = vmatpush2.bf16.msra.mxu0 0
    %236 = vmatprep.subr.bf16.mxu0 0
    %237 = vmatpush2.bf16.msra.mxu0 0
    %238 = vmatprep.mubr.bf16.mxu0 0
    %239 = vmatmul.mubr.bf16.gmra.mxu0 %v163
    %v240 = vpop.f32.mrf.mxu0
    %v241 = vadd.f32 %v95, %v240
    %v242 = vpop.f32.mrf.mxu0
    %v243 = vadd.f32 %v99, %v242
    %v244 = vpop.f32.mrf.mxu0
    %v245 = vpop.f32.mrf.mxu0
    %246 = vdwg.mxu0
    %247 = vmatprep.subr.bf16.mxu0 0
    %248 = vmatpush1.bf16.msra.mxu0 0
    %249 = vmatprep.subr.bf16.mxu0 0
    %250 = vmatpush1.bf16.msra.mxu0 0
    %251 = vmatprep.subr.bf16.mxu0 0
    %252 = vmatpush1.bf16.msra.mxu0 0
    %253 = vmatprep.subr.bf16.mxu0 0
    %254 = vmatpush1.bf16.msra.mxu0 0
    %255 = vmatprep.subr.bf16.mxu0 0
    %256 = vmatpush1.bf16.msra.mxu0 0
    %257 = vmatprep.subr.bf16.mxu0 0
    %258 = vmatpush1.bf16.msra.mxu0 0
    %259 = vmatprep.subr.bf16.mxu0 0
    %260 = vmatpush1.bf16.msra.mxu0 %v150
    %261 = vmatprep.subr.bf16.mxu0 0
    %262 = vmatpush1.bf16.msra.mxu0 %v145
    %263 = vmatprep.subr.bf16.mxu0 0
    %264 = vmatpush2.bf16.msra.mxu0 0
    %265 = vmatprep.subr.bf16.mxu0 0
    %266 = vmatpush2.bf16.msra.mxu0 0
    %267 = vmatprep.subr.bf16.mxu0 0
    %268 = vmatpush2.bf16.msra.mxu0 0
    %269 = vmatprep.subr.bf16.mxu0 0
    %270 = vmatpush2.bf16.msra.mxu0 0
    %271 = vmatprep.subr.bf16.mxu0 0
    %272 = vmatpush2.bf16.msra.mxu0 0
    %273 = vmatprep.subr.bf16.mxu0 0
    %274 = vmatpush2.bf16.msra.mxu0 0
    %275 = vmatprep.subr.bf16.mxu0 0
    %276 = vmatpush2.bf16.msra.mxu0 0
    %277 = vmatprep.subr.bf16.mxu0 0
    %278 = vmatpush2.bf16.msra.mxu0 0
    %279 = vmatprep.mubr.bf16.mxu0 0
    %280 = vmatmul.mubr.bf16.gmra.mxu0 %v163
    %v281 = vpop.f32.mrf.mxu0
    %v282 = vadd.f32 %v103, %v281
    %v283 = vpop.f32.mrf.mxu0
    %v284 = vpop.f32.mrf.mxu0
    %v285 = vpop.f32.mrf.mxu0
    %286 = vdwg.mxu0
    %287 = vmax.xlane.f32.xlu0 %v282
    %v288 = vpop.xlane.xlu0 %287
    %v289 = vsub.f32 %v282, %v288
    %v290 = vmul.f32 %v289, 1.442695
    %v291 = vpow.pop %v290
    %292 = vadd.xlane.f32.xlu0 %v291
    %v293 = vpop.xlane.xlu0 %292
    %v294 = vrcp.pop %v293
    %v295 = vmul.f32 %v291, %v294
    %v296 = vmax.f32 %v200, 0.0
    %298 = vset.pattern.permute.xlu0 0
    %299 = vperm.xlu0 %298, %v295
    %v300 = vpop.permute.xlu0 %299
    %v302 = vmul.f32 %v296, %v300
    %v303 = vmax.f32 %v202, 0.0
    %304 = vset.pattern.permute.xlu0 1
    %305 = vperm.xlu0 %304, %v295
    %v306 = vpop.permute.xlu0 %305
    %v308 = vmul.f32 %v303, %v306
    %v309 = vadd.f32 %v302, %v308
    %v310 = vmax.f32 %v241, 0.0
    %311 = vset.pattern.permute.xlu0 2
    %312 = vperm.xlu0 %311, %v295
    %v313 = vpop.permute.xlu0 %312
    %v315 = vmul.f32 %v310, %v313
    %v316 = vadd.f32 %v309, %v315
    %v317 = vmax.f32 %v243, 0.0
    %318 = vset.pattern.permute.xlu0 3
    %319 = vperm.xlu0 %318, %v295
    %v320 = vpop.permute.xlu0 %319
    %v322 = vmul.f32 %v317, %v320
    %v323 = vadd.f32 %v316, %v322
    %v324 = vpack.c.bf16 %v323, %v323
    %v325 = vld [vmem:[#allocation8] sm:$0xf]
    %v326 = vld [vmem:[#allocation8 + $0x4] sm:$0xf]
    %v327 = vld [vmem:[#allocation8 + $0x8] sm:$0xf]
    %v328 = vld [vmem:[#allocation8 + $0xc] sm:$0xf]
    %v329 = vld [vmem:[%s4] sm:$0x1]
    %v331 = vlaneseq
    %v332 = vshrl.u32 %v331, 7
    %v333 = vsub.s32 0, %v332
    %v334 = vrot.slane %v329, %v333
    %v340 = vunpack.c.l.b16 %v325
    %v341 = vunpack.c.l.b16 %v326
    %v342 = vunpack.c.l.b16 %v327
    %v343 = vunpack.c.l.b16 %v328
    %v344 = vpack.c.b16 %v341, %v340
    %v345 = vpack.c.b16 %v343, %v342
    %v349 = vsel %vm161, %v324, 0
    %351 = vmatprep.subr.bf16.mxu0 0
    %352 = vmatpush1.bf16.msra.mxu0 0
    %353 = vmatprep.subr.bf16.mxu0 0
    %354 = vmatpush1.bf16.msra.mxu0 0
    %355 = vmatprep.subr.bf16.mxu0 0
    %356 = vmatpush1.bf16.msra.mxu0 0
    %357 = vmatprep.subr.bf16.mxu0 0
    %358 = vmatpush1.bf16.msra.mxu0 0
    %359 = vmatprep.subr.bf16.mxu0 0
    %360 = vmatpush1.bf16.msra.mxu0 0
    %361 = vmatprep.subr.bf16.mxu0 0
    %362 = vmatpush1.bf16.msra.mxu0 0
    %363 = vmatprep.subr.bf16.mxu0 0
    %364 = vmatpush1.bf16.msra.mxu0 %v345
    %365 = vmatprep.subr.bf16.mxu0 0
    %366 = vmatpush1.bf16.msra.mxu0 %v344
    %367 = vmatprep.subr.bf16.mxu0 0
    %368 = vmatpush2.bf16.msra.mxu0 0
    %369 = vmatprep.subr.bf16.mxu0 0
    %370 = vmatpush2.bf16.msra.mxu0 0
    %371 = vmatprep.subr.bf16.mxu0 0
    %372 = vmatpush2.bf16.msra.mxu0 0
    %373 = vmatprep.subr.bf16.mxu0 0
    %374 = vmatpush2.bf16.msra.mxu0 0
    %375 = vmatprep.subr.bf16.mxu0 0
    %376 = vmatpush2.bf16.msra.mxu0 0
    %377 = vmatprep.subr.bf16.mxu0 0
    %378 = vmatpush2.bf16.msra.mxu0 0
    %379 = vmatprep.subr.bf16.mxu0 0
    %380 = vmatpush2.bf16.msra.mxu0 0
    %381 = vmatprep.subr.bf16.mxu0 0
    %382 = vmatpush2.bf16.msra.mxu0 0
    %383 = vmatprep.mubr.bf16.mxu0 0
    %384 = vmatmul.mubr.bf16.gmra.mxu0 %v349
    %v385 = vpop.f32.mrf.mxu0
    %v386 = vadd.f32 %v334, %v385
    %v387 = vpop.f32.mrf.mxu0
    %v388 = vpop.f32.mrf.mxu0
    %v389 = vpop.f32.mrf.mxu0
    %390 = vdwg.mxu0
    %v391 = vxor.u32 %v386, 2147483648
    %v392 = vmul.f32 %v391, 1.442695
    %v393 = vpow.pop %v392
    %v394 = vadd.f32 %v393, 1.0
    %v395 = vrcp.pop %v394
    %v396 = vmul.f32 1.0, %v395
    %v397 = vld [vmem:[%s5] sm:$0x1]
    %v398 = vpack.c.bf16 %v396, %v396
    %v399 = vld [vmem:[#allocation2] sm:$0x1]
    %401 = vset.pattern.permute.xlu0 0
    %402 = vperm.xlu0 %401, %v399
    %v403 = vpop.permute.xlu0 %402
    %v405 = vlaneseq
    %v406 = vshrl.u32 %v405, 7
    %v407 = vsub.s32 0, %v406
    %v408 = vrot.slane %v403, %v407
    %v410 = vsel %vm161, %v397, 0
    %v413 = vsel %vm161, %v398, 0
    %415 = vmatprep.subr.bf16.mxu0 0
    %416 = vmatpush1.bf16.xpose.msra.mxu0 0
    %417 = vmatprep.subr.bf16.mxu0 0
    %418 = vmatpush1.bf16.xpose.msra.mxu0 0
    %419 = vmatprep.subr.bf16.mxu0 0
    %420 = vmatpush1.bf16.xpose.msra.mxu0 0
    %421 = vmatprep.subr.bf16.mxu0 0
    %422 = vmatpush1.bf16.xpose.msra.mxu0 0
    %423 = vmatprep.subr.bf16.mxu0 0
    %424 = vmatpush1.bf16.xpose.msra.mxu0 0
    %425 = vmatprep.subr.bf16.mxu0 0
    %426 = vmatpush1.bf16.xpose.msra.mxu0 0
    %427 = vmatprep.subr.bf16.mxu0 0
    %428 = vmatpush1.bf16.xpose.msra.mxu0 0
    %429 = vmatprep.subr.bf16.mxu0 0
    %430 = vmatpush1.bf16.xpose.msra.mxu0 %v413
    %431 = vmatprep.subr.bf16.mxu0 0
    %432 = vmatpush2.bf16.xpose.msra.mxu0 0
    %433 = vmatprep.subr.bf16.mxu0 0
    %434 = vmatpush2.bf16.xpose.msra.mxu0 0
    %435 = vmatprep.subr.bf16.mxu0 0
    %436 = vmatpush2.bf16.xpose.msra.mxu0 0
    %437 = vmatprep.subr.bf16.mxu0 0
    %438 = vmatpush2.bf16.xpose.msra.mxu0 0
    %439 = vmatprep.subr.bf16.mxu0 0
    %440 = vmatpush2.bf16.xpose.msra.mxu0 0
    %441 = vmatprep.subr.bf16.mxu0 0
    %442 = vmatpush2.bf16.xpose.msra.mxu0 0
    %443 = vmatprep.subr.bf16.mxu0 0
    %444 = vmatpush2.bf16.xpose.msra.mxu0 0
    %445 = vmatprep.subr.bf16.mxu0 0
    %446 = vmatpush2.bf16.xpose.msra.mxu0 0
    %447 = vmatprep.mubr.bf16.mxu0 0
    %448 = vmatmul.mubr.bf16.gmra.mxu0 %v410
    %v449 = vpop.f32.mrf.mxu0
    %v450 = vadd.f32 %v408, %v449
    %v451 = vpop.f32.mrf.mxu0
    %v452 = vpop.f32.mrf.mxu0
    %v453 = vpop.f32.mrf.mxu0
    %454 = vdwg.mxu0
    %vm455 = vcmask 57344
    %456 = vst.msk [vmem:[#allocation9] sm:$0x1] %vm455, %v450
    // Predicated region
    $region42: #{tpu_custom_call.1} parent=1 // pred_check
      _
    $region43: #{tpu_custom_call.1} parent=1 // pred_check_branch
      %458 = sbr.rel (0) target = $region45
    $region44: #{tpu_custom_call.1} parent=1 // pred_region
      %s460 = ssub.s32 16, 16
      %461 = vsyncadd [#allocation5], %s460
      %s463 = sshll.u32 [#allocation9], 4
      %s464 = int_to_ptr.vmem [resolvable:$true] %s463
      %466 = dma.vmem_to_hbm [thread:$0]  %s464, 16, %s7, [#allocation5]
    $region45: #{tpu_custom_call.1} parent=1 // pred_fallthru
      _
    // Predicated region
    $region46: #{tpu_custom_call.1} parent=1 // pred_check
      _
    $region47: #{tpu_custom_call.1} parent=1 // pred_check_branch
      %468 = sbr.rel (0) target = $region49
    $region48: #{tpu_custom_call.1} parent=1 // pred_region
      %469 = dma.done [#allocation5], 16
    $region49: #{tpu_custom_call.1} parent=1 // pred_fallthru
      _
    %470 = vsyncpa [#allocation4], 1
    %471 = vsyncpa [#allocation7], 1
    %472 = vsyncpa [#allocation5], 1

// kernel: tpu_custom_call.1
$region0: #{tpu_custom_call.1}
  #allocation0 [shape = 'u32[]', space=smem, size = 0x4, offset = 0x4, fixed_abs, tag = 'smem constant byte address 0x4 - core index']
  #allocation1 [shape = 'u32[144,128]{1,0:T(1,128)}', space=vmem, size = 0x12000, scoped, tag = 'internal scratch']
  #allocation2 [shape = 'f32[1,1]{1,0:T(1,128)S(1)}', space=vmem, size = 0x200, scoped, tag = 'scoped memory for tpu_custom_call.1']
  %s0 = inlined_call_operand.hbm [shape: bf16[8,32], index: 0, kind: input, shape index: {}]
  %s1 = inlined_call_operand.hbm [shape: bf16[32,640], index: 1, kind: input, shape index: {}]
  %s2 = inlined_call_operand.vmem [shape: f32[1,640], index: 2, kind: input, shape index: {}]
  %s3 = inlined_call_operand.hbm [shape: bf16[32,32], index: 3, kind: input, shape index: {}]
  %s4 = inlined_call_operand.vmem [shape: f32[1,32], index: 4, kind: input, shape index: {}]
  %s5 = inlined_call_operand.vmem [shape: bf16[1,32], index: 5, kind: input, shape index: {}]
  %s6 = inlined_call_operand.<no memory space> [shape: f32[1,1], index: 6, kind: input, shape index: {}]
  %s7 = inlined_call_operand.hbm [shape: f32[1,8], index: 7, kind: output, shape index: {}]
  %s8 = sld [smem:[#allocation0]]
  $region50: #{tpu_custom_call.1} parent=0
    _
  %s10 = ssub.s32 1, %s8
  %s11 = scalar_select 0, %s10, %s8
  %v12 = vstv %s6
  %13 = vst [vmem:[#allocation2] sm:$0x1] %v12
  $region1: #{tpu_custom_call.1} parent=0
    #allocation3 [shape = 'u8[2048]{0}', space=vmem, size = 0x800, scoped, tag = 'input window, operand 0, single buffered']
    #allocation4 [shape = 's32[1]{0}', space=sflag, size = 0x4, scoped, tag = 'scoped memory for tpu_custom_call.1']
    #allocation5 [shape = 's32[1]{0}', space=sflag, size = 0x4, scoped, tag = 'scoped memory for tpu_custom_call.1']
    #allocation6 [shape = 'u8[40960]{0}', space=vmem, size = 0xa000, scoped, tag = 'input window, operand 1, single buffered']
    #allocation7 [shape = 's32[1]{0}', space=sflag, size = 0x4, scoped, tag = 'scoped memory for tpu_custom_call.1']
    #allocation8 [shape = 'u8[8192]{0}', space=vmem, size = 0x2000, scoped, tag = 'input window, operand 3, single buffered']
    #allocation9 [shape = 'u8[512]{0}', space=vmem, size = 0x400, scoped, tag = 'output window, operand 0, single buffered']
    %14 = vsyncpa [#allocation4], 0
    %15 = vsyncpa [#allocation7], 0
    %16 = vsyncpa [#allocation5], 0
    // Predicated region
    $region2: #{tpu_custom_call.1} parent=1 // pred_check
      _
    $region3: #{tpu_custom_call.1} parent=1 // pred_check_branch
      %18 = sbr.rel (0) target = $region5
    $region4: #{tpu_custom_call.1} parent=1 // pred_region
      %s20 = ssub.s32 64, 64
      %21 = vsyncadd [#allocation4], %s20
      %s23 = sshll.u32 [#allocation3], 4
      %s24 = int_to_ptr.vmem [resolvable:$true] %s23
      %26 = dma.hbm_to_vmem [thread:$0]  %s0, 64, %s24, [#allocation4]
    $region5: #{tpu_custom_call.1} parent=1 // pred_fallthru
      _
    // Predicated region
    $region6: #{tpu_custom_call.1} parent=1 // pred_check
      _
    $region7: #{tpu_custom_call.1} parent=1 // pred_check_branch
      %28 = sbr.rel (0) target = $region9
    $region8: #{tpu_custom_call.1} parent=1 // pred_region
      %s30 = ssub.s32 1280, 1280
      %31 = vsyncadd [#allocation7], %s30
      %s32 = sshll.u32 [#allocation6], 4
      %s33 = int_to_ptr.vmem [resolvable:$true] %s32
      %38 = dma.hbm_to_vmem [thread:$0]  %s1, 1280, %s33, [#allocation7], 320, 320, 20
    $region9: #{tpu_custom_call.1} parent=1 // pred_fallthru
      _
    // Predicated region
    $region10: #{tpu_custom_call.1} parent=1 // pred_check
      _
    $region11: #{tpu_custom_call.1} parent=1 // pred_check_branch
      %40 = sbr.rel (0) target = $region13
    $region12: #{tpu_custom_call.1} parent=1 // pred_region
      _
    $region13: #{tpu_custom_call.1} parent=1 // pred_fallthru
      _
    // Predicated region
    $region14: #{tpu_custom_call.1} parent=1 // pred_check
      _
    $region15: #{tpu_custom_call.1} parent=1 // pred_check_branch
      %42 = sbr.rel (0) target = $region17
    $region16: #{tpu_custom_call.1} parent=1 // pred_region
      %s44 = ssub.s32 256, 256
      %45 = vsyncadd [#allocation7], %s44
      %s46 = sshll.u32 [#allocation8], 4
      %s47 = int_to_ptr.vmem [resolvable:$true] %s46
      %52 = dma.hbm_to_vmem [thread:$0]  %s3, 256, %s47, [#allocation7], 64, 64, 4
    $region17: #{tpu_custom_call.1} parent=1 // pred_fallthru
      _
    // Predicated region
    $region18: #{tpu_custom_call.1} parent=1 // pred_check
      _
    $region19: #{tpu_custom_call.1} parent=1 // pred_check_branch
      %54 = sbr.rel (0) target = $region21
    $region20: #{tpu_custom_call.1} parent=1 // pred_region
      _
    $region21: #{tpu_custom_call.1} parent=1 // pred_fallthru
      _
    // Predicated region
    $region22: #{tpu_custom_call.1} parent=1 // pred_check
      _
    $region23: #{tpu_custom_call.1} parent=1 // pred_check_branch
      %56 = sbr.rel (0) target = $region25
    $region24: #{tpu_custom_call.1} parent=1 // pred_region
      _
    $region25: #{tpu_custom_call.1} parent=1 // pred_fallthru
      _
    // Predicated region
    $region26: #{tpu_custom_call.1} parent=1 // pred_check
      _
    $region27: #{tpu_custom_call.1} parent=1 // pred_check_branch
      %58 = sbr.rel (0) target = $region29
    $region28: #{tpu_custom_call.1} parent=1 // pred_region
      _
    $region29: #{tpu_custom_call.1} parent=1 // pred_fallthru
      _
    // Predicated region
    $region30: #{tpu_custom_call.1} parent=1 // pred_check
      _
    $region31: #{tpu_custom_call.1} parent=1 // pred_check_branch
      %60 = sbr.rel (0) target = $region33
    $region32: #{tpu_custom_call.1} parent=1 // pred_region
      %61 = dma.done [#allocation4], 64
    $region33: #{tpu_custom_call.1} parent=1 // pred_fallthru
      _
    // Predicated region
    $region34: #{tpu_custom_call.1} parent=1 // pred_check
      _
    $region35: #{tpu_custom_call.1} parent=1 // pred_check_branch
      %63 = sbr.rel (0) target = $region37
    $region36: #{tpu_custom_call.1} parent=1 // pred_region
      %64 = dma.done [#allocation7], 1280
    $region37: #{tpu_custom_call.1} parent=1 // pred_fallthru
      _
    // Predicated region
    $region38: #{tpu_custom_call.1} parent=1 // pred_check
      _
    $region39: #{tpu_custom_call.1} parent=1 // pred_check_branch
      %66 = sbr.rel (0) target = $region41
    $region40: #{tpu_custom_call.1} parent=1 // pred_region
      %67 = dma.done [#allocation7], 256
    $region41: #{tpu_custom_call.1} parent=1 // pred_fallthru
      _
    %v69 = vld [vmem:[#allocation3] sm:$0xf]
    %v70 = vld [vmem:[#allocation6] sm:$0xff]
    %v71 = vld [vmem:[#allocation6 + $0x8] sm:$0xff]
    %v72 = vld [vmem:[#allocation6 + $0x10] sm:$0xf]
    %v73 = vld [vmem:[#allocation6 + $0x14] sm:$0xff]
    %v74 = vld [vmem:[#allocation6 + $0x1c] sm:$0xff]
    %v75 = vld [vmem:[#allocation6 + $0x24] sm:$0xf]
    %v76 = vld [vmem:[#allocation6 + $0x28] sm:$0xff]
    %v77 = vld [vmem:[#allocation6 + $0x30] sm:$0xff]
    %v78 = vld [vmem:[#allocation6 + $0x38] sm:$0xf]
    %v79 = vld [vmem:[#allocation6 + $0x3c] sm:$0xff]
    %v80 = vld [vmem:[#allocation6 + $0x44] sm:$0xff]
    %v81 = vld [vmem:[#allocation6 + $0x4c] sm:$0xf]
    %v82 = vld [vmem:[%s2] sm:$0x1f]
    %v84 = vlaneseq
    %v85 = vshrl.u32 %v84, 7
    %v86 = vsub.s32 0, %v85
    %v87 = vrot.slane %v82, %v86
    %v88 = vlaneseq
    %v89 = vshrl.u32 %v88, 7
    %v90 = vsub.s32 1, %v89
    %v91 = vrot.slane %v82, %v90
    %v92 = vlaneseq
    %v93 = vshrl.u32 %v92, 7
    %v94 = vsub.s32 2, %v93
    %v95 = vrot.slane %v82, %v94
    %v96 = vlaneseq
    %v97 = vshrl.u32 %v96, 7
    %v98 = vsub.s32 3, %v97
    %v99 = vrot.slane %v82, %v98
    %v100 = vlaneseq
    %v101 = vshrl.u32 %v100, 7
    %v102 = vsub.s32 4, %v101
    %v103 = vrot.slane %v82, %v102
    %v121 = vunpack.c.l.b16 %v70
    %v122 = vunpack.c.h.b16 %v70
    %v123 = vunpack.c.l.b16 %v71
    %v124 = vunpack.c.h.b16 %v71
    %v125 = vunpack.c.l.b16 %v72
    %v126 = vunpack.c.l.b16 %v73
    %v127 = vunpack.c.h.b16 %v73
    %v128 = vunpack.c.l.b16 %v74
    %v129 = vunpack.c.h.b16 %v74
    %v130 = vunpack.c.l.b16 %v75
    %v131 = vunpack.c.l.b16 %v76
    %v132 = vunpack.c.h.b16 %v76
    %v133 = vunpack.c.l.b16 %v77
    %v134 = vunpack.c.h.b16 %v77
    %v135 = vunpack.c.l.b16 %v78
    %v136 = vunpack.c.l.b16 %v79
    %v137 = vunpack.c.h.b16 %v79
    %v138 = vunpack.c.l.b16 %v80
    %v139 = vunpack.c.h.b16 %v80
    %v140 = vunpack.c.l.b16 %v81
    %v141 = vpack.c.b16 %v126, %v121
    %v142 = vpack.c.b16 %v127, %v122
    %v143 = vpack.c.b16 %v128, %v123
    %v144 = vpack.c.b16 %v129, %v124
    %v145 = vpack.c.b16 %v130, %v125
    %v146 = vpack.c.b16 %v136, %v131
    %v147 = vpack.c.b16 %v137, %v132
    %v148 = vpack.c.b16 %v138, %v133
    %v149 = vpack.c.b16 %v139, %v134
    %v150 = vpack.c.b16 %v140, %v135
    %vm161 = vcmask 261120
    %v163 = vsel %vm161, %v69, 0
    %165 = vmatprep.subr.bf16.mxu0 0
    %166 = vmatpush1.bf16.msra.mxu0 0
    %167 = vmatprep.subr.bf16.mxu0 0
    %168 = vmatpush1.bf16.msra.mxu0 0
    %169 = vmatprep.subr.bf16.mxu0 0
    %170 = vmatpush1.bf16.msra.mxu0 0
    %171 = vmatprep.subr.bf16.mxu0 0
    %172 = vmatpush1.bf16.msra.mxu0 0
    %173 = vmatprep.subr.bf16.mxu0 0
    %174 = vmatpush1.bf16.msra.mxu0 0
    %175 = vmatprep.subr.bf16.mxu0 0
    %176 = vmatpush1.bf16.msra.mxu0 0
    %177 = vmatprep.subr.bf16.mxu0 %v147
    %178 = vmatpush1.bf16.msra.mxu0 %v146
    %179 = vmatprep.subr.bf16.mxu0 %v142
    %180 = vmatpush1.bf16.msra.mxu0 %v141
    %181 = vmatprep.subr.bf16.mxu0 0
    %182 = vmatpush2.bf16.msra.mxu0 0
    %183 = vmatprep.subr.bf16.mxu0 0
    %184 = vmatpush2.bf16.msra.mxu0 0
    %185 = vmatprep.subr.bf16.mxu0 0
    %186 = vmatpush2.bf16.msra.mxu0 0
    %187 = vmatprep.subr.bf16.mxu0 0
    %188 = vmatpush2.bf16.msra.mxu0 0
    %189 = vmatprep.subr.bf16.mxu0 0
    %190 = vmatpush2.bf16.msra.mxu0 0
    %191 = vmatprep.subr.bf16.mxu0 0
    %192 = vmatpush2.bf16.msra.mxu0 0
    %193 = vmatprep.subr.bf16.mxu0 0
    %194 = vmatpush2.bf16.msra.mxu0 0
    %195 = vmatprep.subr.bf16.mxu0 0
    %196 = vmatpush2.bf16.msra.mxu0 0
    %197 = vmatprep.mubr.bf16.mxu0 0
    %198 = vmatmul.mubr.bf16.gmra.mxu0 %v163
    %v199 = vpop.f32.mrf.mxu0
    %v200 = vadd.f32 %v87, %v199
    %v201 = vpop.f32.mrf.mxu0
    %v202 = vadd.f32 %v91, %v201
    %v203 = vpop.f32.mrf.mxu0
    %v204 = vpop.f32.mrf.mxu0
    %205 = vdwg.mxu0
    %206 = vmatprep.subr.bf16.mxu0 0
    %207 = vmatpush1.bf16.msra.mxu0 0
    %208 = vmatprep.subr.bf16.mxu0 0
    %209 = vmatpush1.bf16.msra.mxu0 0
    %210 = vmatprep.subr.bf16.mxu0 0
    %211 = vmatpush1.bf16.msra.mxu0 0
    %212 = vmatprep.subr.bf16.mxu0 0
    %213 = vmatpush1.bf16.msra.mxu0 0
    %214 = vmatprep.subr.bf16.mxu0 0
    %215 = vmatpush1.bf16.msra.mxu0 0
    %216 = vmatprep.subr.bf16.mxu0 0
    %217 = vmatpush1.bf16.msra.mxu0 0
    %218 = vmatprep.subr.bf16.mxu0 %v149
    %219 = vmatpush1.bf16.msra.mxu0 %v148
    %220 = vmatprep.subr.bf16.mxu0 %v144
    %221 = vmatpush1.bf16.msra.mxu0 %v143
    %222 = vmatprep.subr.bf16.mxu0 0
    %223 = vmatpush2.bf16.msra.mxu0 0
    %224 = vmatprep.subr.bf16.mxu0 0
    %225 = vmatpush2.bf16.msra.mxu0 0
    %226 = vmatprep.subr.bf16.mxu0 0
    %227 = vmatpush2.bf16.msra.mxu0 0
    %228 = vmatprep.subr.bf16.mxu0 0
    %229 = vmatpush2.bf16.msra.mxu0 0
    %230 = vmatprep.subr.bf16.mxu0 0
    %231 = vmatpush2.bf16.msra.mxu0 0
    %232 = vmatprep.subr.bf16.mxu0 0
    %233 = vmatpush2.bf16.msra.mxu0 0
    %234 = vmatprep.subr.bf16.mxu0 0
    %235 = vmatpush2.bf16.msra.mxu0 0
    %236 = vmatprep.subr.bf16.mxu0 0
    %237 = vmatpush2.bf16.msra.mxu0 0
    %238 = vmatprep.mubr.bf16.mxu0 0
    %239 = vmatmul.mubr.bf16.gmra.mxu0 %v163
    %v240 = vpop.f32.mrf.mxu0
    %v241 = vadd.f32 %v95, %v240
    %v242 = vpop.f32.mrf.mxu0
    %v243 = vadd.f32 %v99, %v242
    %v244 = vpop.f32.mrf.mxu0
    %v245 = vpop.f32.mrf.mxu0
    %246 = vdwg.mxu0
    %247 = vmatprep.subr.bf16.mxu0 0
    %248 = vmatpush1.bf16.msra.mxu0 0
    %249 = vmatprep.subr.bf16.mxu0 0
    %250 = vmatpush1.bf16.msra.mxu0 0
    %251 = vmatprep.subr.bf16.mxu0 0
    %252 = vmatpush1.bf16.msra.mxu0 0
    %253 = vmatprep.subr.bf16.mxu0 0
    %254 = vmatpush1.bf16.msra.mxu0 0
    %255 = vmatprep.subr.bf16.mxu0 0
    %256 = vmatpush1.bf16.msra.mxu0 0
    %257 = vmatprep.subr.bf16.mxu0 0
    %258 = vmatpush1.bf16.msra.mxu0 0
    %259 = vmatprep.subr.bf16.mxu0 0
    %260 = vmatpush1.bf16.msra.mxu0 %v150
    %261 = vmatprep.subr.bf16.mxu0 0
    %262 = vmatpush1.bf16.msra.mxu0 %v145
    %263 = vmatprep.subr.bf16.mxu0 0
    %264 = vmatpush2.bf16.msra.mxu0 0
    %265 = vmatprep.subr.bf16.mxu0 0
    %266 = vmatpush2.bf16.msra.mxu0 0
    %267 = vmatprep.subr.bf16.mxu0 0
    %268 = vmatpush2.bf16.msra.mxu0 0
    %269 = vmatprep.subr.bf16.mxu0 0
    %270 = vmatpush2.bf16.msra.mxu0 0
    %271 = vmatprep.subr.bf16.mxu0 0
    %272 = vmatpush2.bf16.msra.mxu0 0
    %273 = vmatprep.subr.bf16.mxu0 0
    %274 = vmatpush2.bf16.msra.mxu0 0
    %275 = vmatprep.subr.bf16.mxu0 0
    %276 = vmatpush2.bf16.msra.mxu0 0
    %277 = vmatprep.subr.bf16.mxu0 0
    %278 = vmatpush2.bf16.msra.mxu0 0
    %279 = vmatprep.mubr.bf16.mxu0 0
    %280 = vmatmul.mubr.bf16.gmra.mxu0 %v163
    %v281 = vpop.f32.mrf.mxu0
    %v282 = vadd.f32 %v103, %v281
    %v283 = vpop.f32.mrf.mxu0
    %v284 = vpop.f32.mrf.mxu0
    %v285 = vpop.f32.mrf.mxu0
    %286 = vdwg.mxu0
    %287 = vmax.xlane.f32.xlu0 %v282
    %v288 = vpop.xlane.xlu0 %287
    %v289 = vsub.f32 %v282, %v288
    %v290 = vmul.f32 %v289, 1.442695
    %v291 = vpow.pop %v290
    %292 = vadd.xlane.f32.xlu0 %v291
    %v293 = vpop.xlane.xlu0 %292
    %v294 = vrcp.pop %v293
    %v295 = vmul.f32 %v291, %v294
    %v296 = vmax.f32 %v200, 0.0
    %298 = vset.pattern.permute.xlu0 0
    %299 = vperm.xlu0 %298, %v295
    %v300 = vpop.permute.xlu0 %299
    %v302 = vmul.f32 %v296, %v300
    %v303 = vmax.f32 %v202, 0.0
    %304 = vset.pattern.permute.xlu0 1
    %305 = vperm.xlu0 %304, %v295
    %v306 = vpop.permute.xlu0 %305
    %v308 = vmul.f32 %v303, %v306
    %v309 = vadd.f32 %v302, %v308
    %v310 = vmax.f32 %v241, 0.0
    %311 = vset.pattern.permute.xlu0 2
    %312 = vperm.xlu0 %311, %v295
    %v313 = vpop.permute.xlu0 %312
    %v315 = vmul.f32 %v310, %v313
    %v316 = vadd.f32 %v309, %v315
    %v317 = vmax.f32 %v243, 0.0
    %318 = vset.pattern.permute.xlu0 3
    %319 = vperm.xlu0 %318, %v295
    %v320 = vpop.permute.xlu0 %319
    %v322 = vmul.f32 %v317, %v320
    %v323 = vadd.f32 %v316, %v322
    %v324 = vpack.c.bf16 %v323, %v323
    %v325 = vld [vmem:[#allocation8] sm:$0xf]
    %v326 = vld [vmem:[#allocation8 + $0x4] sm:$0xf]
    %v327 = vld [vmem:[#allocation8 + $0x8] sm:$0xf]
    %v328 = vld [vmem:[#allocation8 + $0xc] sm:$0xf]
    %v329 = vld [vmem:[%s4] sm:$0x1]
    %v331 = vlaneseq
    %v332 = vshrl.u32 %v331, 7
    %v333 = vsub.s32 0, %v332
    %v334 = vrot.slane %v329, %v333
    %v340 = vunpack.c.l.b16 %v325
    %v341 = vunpack.c.l.b16 %v326
    %v342 = vunpack.c.l.b16 %v327
    %v343 = vunpack.c.l.b16 %v328
    %v344 = vpack.c.b16 %v341, %v340
    %v345 = vpack.c.b16 %v343, %v342
    %v349 = vsel %vm161, %v324, 0
    %351 = vmatprep.subr.bf16.mxu0 0
    %352 = vmatpush1.bf16.msra.mxu0 0
    %353 = vmatprep.subr.bf16.mxu0 0
    %354 = vmatpush1.bf16.msra.mxu0 0
    %355 = vmatprep.subr.bf16.mxu0 0
    %356 = vmatpush1.bf16.msra.mxu0 0
    %357 = vmatprep.subr.bf16.mxu0 0
    %358 = vmatpush1.bf16.msra.mxu0 0
    %359 = vmatprep.subr.bf16.mxu0 0
    %360 = vmatpush1.bf16.msra.mxu0 0
    %361 = vmatprep.subr.bf16.mxu0 0
    %362 = vmatpush1.bf16.msra.mxu0 0
    %363 = vmatprep.subr.bf16.mxu0 0
    %364 = vmatpush1.bf16.msra.mxu0 %v345
    %365 = vmatprep.subr.bf16.mxu0 0
    %366 = vmatpush1.bf16.msra.mxu0 %v344
    %367 = vmatprep.subr.bf16.mxu0 0
    %368 = vmatpush2.bf16.msra.mxu0 0
    %369 = vmatprep.subr.bf16.mxu0 0
    %370 = vmatpush2.bf16.msra.mxu0 0
    %371 = vmatprep.subr.bf16.mxu0 0
    %372 = vmatpush2.bf16.msra.mxu0 0
    %373 = vmatprep.subr.bf16.mxu0 0
    %374 = vmatpush2.bf16.msra.mxu0 0
    %375 = vmatprep.subr.bf16.mxu0 0
    %376 = vmatpush2.bf16.msra.mxu0 0
    %377 = vmatprep.subr.bf16.mxu0 0
    %378 = vmatpush2.bf16.msra.mxu0 0
    %379 = vmatprep.subr.bf16.mxu0 0
    %380 = vmatpush2.bf16.msra.mxu0 0
    %381 = vmatprep.subr.bf16.mxu0 0
    %382 = vmatpush2.bf16.msra.mxu0 0
    %383 = vmatprep.mubr.bf16.mxu0 0
    %384 = vmatmul.mubr.bf16.gmra.mxu0 %v349
    %v385 = vpop.f32.mrf.mxu0
    %v386 = vadd.f32 %v334, %v385
    %v387 = vpop.f32.mrf.mxu0
    %v388 = vpop.f32.mrf.mxu0
    %v389 = vpop.f32.mrf.mxu0
    %390 = vdwg.mxu0
    %v391 = vxor.u32 %v386, 2147483648
    %v392 = vmul.f32 %v391, 1.442695
    %v393 = vpow.pop %v392
    %v394 = vadd.f32 %v393, 1.0
    %v395 = vrcp.pop %v394
    %v396 = vmul.f32 1.0, %v395
    %v397 = vld [vmem:[%s5] sm:$0x1]
    %v398 = vpack.c.bf16 %v396, %v396
    %v399 = vld [vmem:[#allocation2] sm:$0x1]
    %401 = vset.pattern.permute.xlu0 0
    %402 = vperm.xlu0 %401, %v399
    %v403 = vpop.permute.xlu0 %402
    %v405 = vlaneseq
    %v406 = vshrl.u32 %v405, 7
    %v407 = vsub.s32 0, %v406
    %v408 = vrot.slane %v403, %v407
    %v410 = vsel %vm161, %v397, 0
    %v413 = vsel %vm161, %v398, 0
    %415 = vmatprep.subr.bf16.mxu0 0
    %416 = vmatpush1.bf16.xpose.msra.mxu0 0
    %417 = vmatprep.subr.bf16.mxu0 0
    %418 = vmatpush1.bf16.xpose.msra.mxu0 0
    %419 = vmatprep.subr.bf16.mxu0 0
    %420 = vmatpush1.bf16.xpose.msra.mxu0 0
    %421 = vmatprep.subr.bf16.mxu0 0
    %422 = vmatpush1.bf16.xpose.msra.mxu0 0
    %423 = vmatprep.subr.bf16.mxu0 0
    %424 = vmatpush1.bf16.xpose.msra.mxu0 0
    %425 = vmatprep.subr.bf16.mxu0 0
    %426 = vmatpush1.bf16.xpose.msra.mxu0 0
    %427 = vmatprep.subr.bf16.mxu0 0
    %428 = vmatpush1.bf16.xpose.msra.mxu0 0
    %429 = vmatprep.subr.bf16.mxu0 0
    %430 = vmatpush1.bf16.xpose.msra.mxu0 %v413
    %431 = vmatprep.subr.bf16.mxu0 0
    %432 = vmatpush2.bf16.xpose.msra.mxu0 0
    %433 = vmatprep.subr.bf16.mxu0 0
    %434 = vmatpush2.bf16.xpose.msra.mxu0 0
    %435 = vmatprep.subr.bf16.mxu0 0
    %436 = vmatpush2.bf16.xpose.msra.mxu0 0
    %437 = vmatprep.subr.bf16.mxu0 0
    %438 = vmatpush2.bf16.xpose.msra.mxu0 0
    %439 = vmatprep.subr.bf16.mxu0 0
    %440 = vmatpush2.bf16.xpose.msra.mxu0 0
    %441 = vmatprep.subr.bf16.mxu0 0
    %442 = vmatpush2.bf16.xpose.msra.mxu0 0
    %443 = vmatprep.subr.bf16.mxu0 0
    %444 = vmatpush2.bf16.xpose.msra.mxu0 0
    %445 = vmatprep.subr.bf16.mxu0 0
    %446 = vmatpush2.bf16.xpose.msra.mxu0 0
    %447 = vmatprep.mubr.bf16.mxu0 0
    %448 = vmatmul.mubr.bf16.gmra.mxu0 %v410
    %v449 = vpop.f32.mrf.mxu0
    %v450 = vadd.f32 %v408, %v449
    %v451 = vpop.f32.mrf.mxu0
    %v452 = vpop.f32.mrf.mxu0
    %v453 = vpop.f32.mrf.mxu0
    %454 = vdwg.mxu0
    %vm455 = vcmask 57344
    %456 = vst.msk [vmem:[#allocation9] sm:$0x1] %vm455, %v450
    // Predicated region
    $region42: #{tpu_custom_call.1} parent=1 // pred_check
      _
    $region43: #{tpu_custom_call.1} parent=1 // pred_check_branch
      %458 = sbr.rel (0) target = $region45
    $region44: #{tpu_custom_call.1} parent=1 // pred_region
      %s460 = ssub.s32 16, 16
      %461 = vsyncadd [#allocation5], %s460
      %s463 = sshll.u32 [#allocation9], 4
      %s464 = int_to_ptr.vmem [resolvable:$true] %s463
      %466 = dma.vmem_to_hbm [thread:$0]  %s464, 16, %s7, [#allocation5]
    $region45: #{tpu_custom_call.1} parent=1 // pred_fallthru
      _
    // Predicated region
    $region46: #{tpu_custom_call.1} parent=1 // pred_check
      _
    $region47: #{tpu_custom_call.1} parent=1 // pred_check_branch
      %468 = sbr.rel (0) target = $region49
    $region48: #{tpu_custom_call.1} parent=1 // pred_region
      %469 = dma.done [#allocation5], 16
    $region49: #{tpu_custom_call.1} parent=1 // pred_fallthru
      _
    %470 = vsyncpa [#allocation4], 1
    %471 = vsyncpa [#allocation7], 1
    %472 = vsyncpa [#allocation5], 1

</llo_original>
